<compile_context>
chip_gen: v6e
topology: v6e:2x2x1
jax: 0.10.0
libtpu: 0.0.40
codegen_flags: <defaults>
</compile_context>

<pallas_src>
import functools

import jax
import jax.numpy as jnp
import numpy as np
from jax import lax
from jax.experimental import pallas as pl
from jax.experimental.pallas import tpu as pltpu

LANES = 128
TARGET_BLOCK_BYTES = 2 << 20        # ~2 MiB input blocks (x2 for double buffer)
MAX_TD = 8192                       # at most 64 unrolled 128-lane chunks/block
MAX_TN = 128                        # accumulator height cap (16 vregs / partial)
MIN_SPLIT_BLOCK_BYTES = 512 << 10   # only split rows (megacore) if halves stay big
TINY_BYTES = 2 << 20                # below this, plain XLA beats kernel launch
VMEM_LIMIT_BYTES = 32 << 20         # explicit: v5e scoped default is only 16 MiB
N_ACC = 2                           # independent partial accumulators


def _round_up(x, m):
    return ((x + m - 1) // m) * m


def _cdiv(a, b):
    return -(-a // b)


def _sq_partials_kernel(x_ref, out_ref, *, td, rem, n_acc):
    """Accumulate lane-wise (per-row, per-128-lane) partial sums of squares.

    grid = (row_tiles, feature_tiles); feature axis is the reduction (last,
    "arbitrary"); the (TN, 128) output block stays resident across it.
    `rem` (static) = number of valid columns in the LAST feature tile; the
    trailing out-of-bounds lanes of that tile are masked before squaring.
    """
    j = pl.program_id(1)

    @pl.when(j == 0)
    def _init():
        out_ref[...] = jnp.zeros_like(out_ref)

    def accum(n_full, partial):
        # n_full full 128-lane chunks + optional masked partial chunk.
        accs = [None] * n_acc

        def add(k, sq):
            accs[k] = sq if accs[k] is None else accs[k] + sq

        for c in range(n_full):
            v = x_ref[:, c * LANES:(c + 1) * LANES].astype(jnp.float32)
            add(c % n_acc, v * v)
        if partial:
            v = x_ref[:, n_full * LANES:(n_full + 1) * LANES].astype(jnp.float32)
            lane = lax.broadcasted_iota(jnp.int32, v.shape, 1)
            v = jnp.where(lane < partial, v, 0.0)   # mask BEFORE squaring
            add(n_full % n_acc, v * v)
        total = None
        for a in accs:
            if a is not None:
                total = a if total is None else total + a
        return total

    if rem == td:
        # feature dim divides evenly: every tile is full, no masking anywhere
        out_ref[...] += accum(td // LANES, 0)
    else:
        last = pl.num_programs(1) - 1

        @pl.when(j < last)
        def _full():
            out_ref[...] += accum(td // LANES, 0)

        @pl.when(j == last)
        def _tail():
            out_ref[...] += accum(rem // LANES, rem % LANES)


def _choose_tiles(n, d, itemsize):
    sub = max(8, 32 // itemsize)          # 8 (f32) / 16 (bf16) sublane multiple
    d_cap = _round_up(d, LANES)

    def td_for(tn):
        t = (TARGET_BLOCK_BYTES // max(tn * itemsize, 1)) // LANES * LANES
        return min(max(LANES, t), MAX_TD, d_cap)

    if n <= MAX_TN:
        tn = n                            # full-dim row block (no row padding)
        half = _round_up(_cdiv(n, 2), sub)
        # Split the parallel row axis into >=2 tiles so v7x can use both
        # TensorCores — but only if each half still yields a big DMA block.
        if half < n and half * td_for(half) * itemsize >= MIN_SPLIT_BLOCK_BYTES:
            tn = half
    else:
        tn = MAX_TN                       # 64-128-row blocks, >=2 row tiles
    return tn, td_for(tn)


def _sum_sq_rows(x2d, *, force_kernel=False):
    """Per-row sum of squares of a 2-D array via the Pallas kernel."""
    n, d = x2d.shape
    itemsize = x2d.dtype.itemsize

    tiny = n * d * itemsize < TINY_BYTES
    if d < LANES or (tiny and not force_kernel):
        # Tiny inputs: kernel-launch + per-step overhead dominates; plain XLA
        # is faster (and d < LANES can't form a 128-lane block at all).
        xf = x2d.astype(jnp.float32)
        return jnp.sum(xf * xf, axis=1)

    tn, td = _choose_tiles(n, d, itemsize)
    nt = _cdiv(d, td)
    rem = d - (nt - 1) * td               # valid cols in the last feature tile

    kernel = functools.partial(_sq_partials_kernel, td=td, rem=rem, n_acc=N_ACC)
    partials = pl.pallas_call(
        kernel,
        out_shape=jax.ShapeDtypeStruct((n, LANES), jnp.float32),
        grid_spec=pltpu.PrefetchScalarGridSpec(
            num_scalar_prefetch=0,
            grid=(_cdiv(n, tn), nt),
            in_specs=[pl.BlockSpec((tn, td), lambda i, j: (i, j))],
            out_specs=pl.BlockSpec((tn, LANES), lambda i, j: (i, 0)),
        ),
        compiler_params=pltpu.CompilerParams(
            dimension_semantics=("parallel", "arbitrary"),
            vmem_limit_bytes=VMEM_LIMIT_BYTES),
        cost_estimate=pl.CostEstimate(
            flops=2 * n * d,
            transcendentals=0,
            bytes_accessed=n * d * itemsize + n * LANES * 4),
    )(x2d)

    # single tiny cross-lane reduce per sample (N x 128 f32)
    return jnp.sum(partials, axis=1)


def gradient_penalty_from_grad(grad_interp, *, force_kernel=False):
    """((||grad_interp.view(N,-1)||_2 - 1)^2).mean() given the gradient."""
    n = grad_interp.shape[0]
    g2d = grad_interp.reshape(n, -1)
    ssq = _sum_sq_rows(g2d, force_kernel=force_kernel)
    norm = jnp.sqrt(ssq)
    return jnp.mean((norm - 1.0) ** 2)


class GradientPenaltyLoss:
    """JAX/Pallas port of the PyTorch GradientPenaltyLoss module.

    PyTorch's forward(interp, interp_crit) replays the recorded autograd
    graph; in JAX that graph is the critic function itself, so the wrapper
    takes `crit_fn` and differentiates it (the ones-filled `grad_outputs`
    buffer is equivalent to differentiating the sum of the critic outputs).
    """

    def __call__(self, interp, crit_fn):
        # TODO(synk): torch.autograd.grad over a pre-recorded graph has no
        # Pallas equivalent; the VJP is taken with jax.grad here and only the
        # penalty reduction runs as a Pallas kernel.
        grad_interp = jax.grad(lambda x: jnp.sum(crit_fn(x)))(interp)
        return gradient_penalty_from_grad(grad_interp)


def _reference_from_grad(grad_interp):
    g = grad_interp.reshape(grad_interp.shape[0], -1).astype(jnp.float32)
    norm = jnp.sqrt(jnp.sum(g * g, axis=1))
    return jnp.mean((norm - 1.0) ** 2)


if __name__ == "__main__":
    key = jax.random.PRNGKey(0)
    k_x, k_w, k_g, k_h = jax.random.split(key, 4)

    # --- A: end-to-end module semantics at small shapes (critic + jax.grad) ---
    interp = jax.random.normal(k_x, (2, 4, 16, 16), dtype=jnp.float32)
    w = jax.random.normal(k_w, (4, 16, 16), dtype=jnp.float32)

    def crit_fn(x):
        # simple deterministic differentiable "critic": one scalar per sample
        return jnp.sum(jnp.tanh(x) * w[None], axis=(1, 2, 3))

    gp = GradientPenaltyLoss()
    got_a = jax.block_until_ready(gp(interp, crit_fn))
    grad_ref = jax.grad(lambda x: jnp.sum(crit_fn(x)))(interp)
    ref_a = jax.block_until_ready(_reference_from_grad(grad_ref))
    ok_a = np.allclose(np.asarray(got_a), np.asarray(ref_a), rtol=1e-4, atol=1e-6)

    # --- B: Pallas kernel path on a small gradient (single feature tile) ---
    g = jax.random.normal(k_g, (2, 4, 16, 16), dtype=jnp.float32) * 0.37
    got_b = jax.block_until_ready(gradient_penalty_from_grad(g, force_kernel=True))
    ref_b = jax.block_until_ready(_reference_from_grad(g))
    ok_b = np.allclose(np.asarray(got_b), np.asarray(ref_b), rtol=1e-4, atol=1e-6)

    # --- C: Pallas kernel path with split row tiles, multi-tile reduction,
    #        ragged last row tile, and a masked ragged feature tail ---
    h = jax.random.normal(k_h, (20, 3, 100, 100), dtype=jnp.float32) * 0.05
    got_c = jax.block_until_ready(gradient_penalty_from_grad(h, force_kernel=True))
    ref_c = jax.block_until_ready(_reference_from_grad(h))
    ok_c = np.allclose(np.asarray(got_c), np.asarray(ref_c), rtol=1e-4, atol=1e-6)

    if ok_a and ok_b and ok_c:
        print("KERNEL_OK")
    else:
        print("MISMATCH",
              np.asarray(got_a), np.asarray(ref_a),
              np.asarray(got_b), np.asarray(ref_b),
              np.asarray(got_c), np.asarray(ref_c))
</pallas_src>

<mosaic_0001>
module attributes {stable_mosaic.version = 11 : i64} {
  func.func @_sq_partials_kernel(%arg0: i32, %arg1: i32, %arg2: memref<2x1024xf32, #tpu.memory_space<vmem>>, %arg3: memref<2x128xf32, #tpu.memory_space<vmem>>) attributes {dimension_semantics = [#tpu.dimension_semantics<parallel>, #tpu.dimension_semantics<arbitrary>], iteration_bounds = array<i64: 1, 1>, scalar_prefetch = 0 : i64, scratch_operands = 0 : i64, tpu.core_type = #tpu.core_type<tc>, window_params = [{transform_indices = @transform_0, window_bounds = array<i64: 2, 1024>}, {transform_indices = @transform_1, window_bounds = array<i64: 2, 128>}]} {
    %c0_i32 = arith.constant 0 : i32
    %0 = arith.cmpi eq, %arg1, %c0_i32 : i32
    %1 = arith.extui %0 : i1 to i32
    %c0_i32_0 = arith.constant 0 : i32
    %2 = arith.cmpi ne, %1, %c0_i32_0 : i32
    scf.if %2 {
      %cst = arith.constant 0.000000e+00 : f32
      %29 = vector.broadcast %cst : f32 to vector<2x128xf32>
      %c0_13 = arith.constant 0 : index
      %c0_14 = arith.constant 0 : index
      %30 = vector.load %arg3[%c0_13, %c0_14] : memref<2x128xf32, #tpu.memory_space<vmem>>, vector<2x128xf32>
      tpu.vector_store %arg3[%c0_13, %c0_14], %29 {strides = array<i32>} : memref<2x128xf32, #tpu.memory_space<vmem>>, vector<2x128xf32>,
    } else {
    }
    %c0 = arith.constant 0 : index
    %c0_1 = arith.constant 0 : index
    %3 = vector.load %arg3[%c0, %c0_1] : memref<2x128xf32, #tpu.memory_space<vmem>>, vector<2x128xf32>
    %c0_2 = arith.constant 0 : index
    %c0_3 = arith.constant 0 : index
    %4 = vector.load %arg2[%c0_2, %c0_3] : memref<2x1024xf32, #tpu.memory_space<vmem>>, vector<2x128xf32>
    %5 = arith.mulf %4, %4 : vector<2x128xf32>
    %c0_4 = arith.constant 0 : index
    %c128 = arith.constant 128 : index
    %6 = vector.load %arg2[%c0_4, %c128] : memref<2x1024xf32, #tpu.memory_space<vmem>>, vector<2x128xf32>
    %7 = arith.mulf %6, %6 : vector<2x128xf32>
    %c0_5 = arith.constant 0 : index
    %c256 = arith.constant 256 : index
    %8 = vector.load %arg2[%c0_5, %c256] : memref<2x1024xf32, #tpu.memory_space<vmem>>, vector<2x128xf32>
    %9 = arith.mulf %8, %8 : vector<2x128xf32>
    %10 = arith.addf %5, %9 : vector<2x128xf32>
    %c0_6 = arith.constant 0 : index
    %c384 = arith.constant 384 : index
    %11 = vector.load %arg2[%c0_6, %c384] : memref<2x1024xf32, #tpu.memory_space<vmem>>, vector<2x128xf32>
    %12 = arith.mulf %11, %11 : vector<2x128xf32>
    %13 = arith.addf %7, %12 : vector<2x128xf32>
    %c0_7 = arith.constant 0 : index
    %c512 = arith.constant 512 : index
    %14 = vector.load %arg2[%c0_7, %c512] : memref<2x1024xf32, #tpu.memory_space<vmem>>, vector<2x128xf32>
    %15 = arith.mulf %14, %14 : vector<2x128xf32>
    %16 = arith.addf %10, %15 : vector<2x128xf32>
    %c0_8 = arith.constant 0 : index
    %c640 = arith.constant 640 : index
    %17 = vector.load %arg2[%c0_8, %c640] : memref<2x1024xf32, #tpu.memory_space<vmem>>, vector<2x128xf32>
    %18 = arith.mulf %17, %17 : vector<2x128xf32>
    %19 = arith.addf %13, %18 : vector<2x128xf32>
    %c0_9 = arith.constant 0 : index
    %c768 = arith.constant 768 : index
    %20 = vector.load %arg2[%c0_9, %c768] : memref<2x1024xf32, #tpu.memory_space<vmem>>, vector<2x128xf32>
    %21 = arith.mulf %20, %20 : vector<2x128xf32>
    %22 = arith.addf %16, %21 : vector<2x128xf32>
    %c0_10 = arith.constant 0 : index
    %c896 = arith.constant 896 : index
    %23 = vector.load %arg2[%c0_10, %c896] : memref<2x1024xf32, #tpu.memory_space<vmem>>, vector<2x128xf32>
    %24 = arith.mulf %23, %23 : vector<2x128xf32>
    %25 = arith.addf %19, %24 : vector<2x128xf32>
    %26 = arith.addf %22, %25 : vector<2x128xf32>
    %27 = arith.addf %3, %26 : vector<2x128xf32>
    %c0_11 = arith.constant 0 : index
    %c0_12 = arith.constant 0 : index
    %28 = vector.load %arg3[%c0_11, %c0_12] : memref<2x128xf32, #tpu.memory_space<vmem>>, vector<2x128xf32>
    tpu.vector_store %arg3[%c0_11, %c0_12], %27 {strides = array<i32>} : memref<2x128xf32, #tpu.memory_space<vmem>>, vector<2x128xf32>,
    return
  }
  func.func @transform_0(%arg0: i32, %arg1: i32) -> (i32, i32) {
    %c0_i32 = arith.constant 0 : i32
    return %arg0, %arg1 : i32, i32
  }
  func.func @transform_1(%arg0: i32, %arg1: i32) -> (i32, i32) {
    %c0_i32 = arith.constant 0 : i32
    %c0_i32_0 = arith.constant 0 : i32
    return %arg0, %c0_i32 : i32, i32
  }
}

</mosaic_0001>

<llo_original>
// kernel: tpu_custom_call.1
$region0: #{tpu_custom_call.1}
  #allocation0 [shape = 'u32[]', space=smem, size = 0x4, offset = 0x4, fixed_abs, tag = 'smem constant byte address 0x4 - core index']
  #allocation1 [shape = 'u32[144,128]{1,0:T(1,128)}', space=vmem, size = 0x12000, scoped, tag = 'internal scratch']
  %s0 = inlined_call_operand.hbm [shape: f32[2,1024], index: 0, kind: input, shape index: {}]
  %s1 = inlined_call_operand.hbm [shape: f32[2,128], index: 1, kind: output, shape index: {}]
  %s2 = sld [smem:[#allocation0]]
  $region22: #{tpu_custom_call.1} parent=0
    _
  %s4 = ssub.s32 1, %s2
  %s5 = scalar_select 0, %s4, %s2
  $region1: #{tpu_custom_call.1} parent=0
    #allocation2 [shape = 'u8[8192]{0}', space=vmem, size = 0x2000, scoped, tag = 'input window, operand 0, single buffered']
    #allocation3 [shape = 's32[1]{0}', space=sflag, size = 0x4, scoped, tag = 'scoped memory for tpu_custom_call.1']
    #allocation4 [shape = 's32[1]{0}', space=sflag, size = 0x4, scoped, tag = 'scoped memory for tpu_custom_call.1']
    #allocation5 [shape = 'u8[1024]{0}', space=vmem, size = 0x400, scoped, tag = 'output window, operand 0, single buffered']
    %6 = vsyncpa [#allocation3], 0
    %7 = vsyncpa [#allocation4], 0
    // Predicated region
    $region2: #{tpu_custom_call.1} parent=1 // pred_check
      _
    $region3: #{tpu_custom_call.1} parent=1 // pred_check_branch
      %9 = sbr.rel (0) target = $region5
    $region4: #{tpu_custom_call.1} parent=1 // pred_region
      %s11 = ssub.s32 256, 256
      %12 = vsyncadd [#allocation3], %s11
      %s14 = sshll.u32 [#allocation2], 4
      %s15 = int_to_ptr.vmem [resolvable:$true] %s14
      %17 = dma.hbm_to_vmem [thread:$0]  %s0, 256, %s15, [#allocation3]
    $region5: #{tpu_custom_call.1} parent=1 // pred_fallthru
      _
    // Predicated region
    $region6: #{tpu_custom_call.1} parent=1 // pred_check
      _
    $region7: #{tpu_custom_call.1} parent=1 // pred_check_branch
      %19 = sbr.rel (0) target = $region9
    $region8: #{tpu_custom_call.1} parent=1 // pred_region
      %20 = dma.done [#allocation3], 256
    $region9: #{tpu_custom_call.1} parent=1 // pred_fallthru
      _
    %p21 = scmp.eq.s32.totalorder 0, 0
    // Predicated region
    $region10: #{tpu_custom_call.1} parent=1 // pred_check
      %p22 = pneg %p21
    $region11: #{tpu_custom_call.1} parent=1 // pred_check_branch
      %24 = sbr.rel (%p22) target = $region13
    $region12: #{tpu_custom_call.1} parent=1 // pred_region
      %25 = vst [vmem:[#allocation5] sm:$0x3] 0.0
    $region13: #{tpu_custom_call.1} parent=1 // pred_fallthru
      _
    %v26 = vld [vmem:[#allocation5] sm:$0x3]
    %v27 = vld [vmem:[#allocation2] sm:$0x3]
    %v28 = vmul.f32 %v27, %v27
    %v29 = vld [vmem:[#allocation2 + $0x2] sm:$0x3]
    %v30 = vmul.f32 %v29, %v29
    %v31 = vld [vmem:[#allocation2 + $0x4] sm:$0x3]
    %v32 = vmul.f32 %v31, %v31
    %v33 = vadd.f32 %v28, %v32
    %v34 = vld [vmem:[#allocation2 + $0x6] sm:$0x3]
    %v35 = vmul.f32 %v34, %v34
    %v36 = vadd.f32 %v30, %v35
    %v37 = vld [vmem:[#allocation2 + $0x8] sm:$0x3]
    %v38 = vmul.f32 %v37, %v37
    %v39 = vadd.f32 %v33, %v38
    %v40 = vld [vmem:[#allocation2 + $0xa] sm:$0x3]
    %v41 = vmul.f32 %v40, %v40
    %v42 = vadd.f32 %v36, %v41
    %v43 = vld [vmem:[#allocation2 + $0xc] sm:$0x3]
    %v44 = vmul.f32 %v43, %v43
    %v45 = vadd.f32 %v39, %v44
    %v46 = vld [vmem:[#allocation2 + $0xe] sm:$0x3]
    %v47 = vmul.f32 %v46, %v46
    %v48 = vadd.f32 %v42, %v47
    %v49 = vadd.f32 %v45, %v48
    %v50 = vadd.f32 %v26, %v49
    %51 = vst [vmem:[#allocation5] sm:$0x3] %v50
    // Predicated region
    $region14: #{tpu_custom_call.1} parent=1 // pred_check
      _
    $region15: #{tpu_custom_call.1} parent=1 // pred_check_branch
      %53 = sbr.rel (0) target = $region17
    $region16: #{tpu_custom_call.1} parent=1 // pred_region
      %s55 = ssub.s32 32, 32
      %56 = vsyncadd [#allocation4], %s55
      %s58 = sshll.u32 [#allocation5], 4
      %s59 = int_to_ptr.vmem [resolvable:$true] %s58
      %61 = dma.vmem_to_hbm [thread:$0]  %s59, 32, %s1, [#allocation4]
    $region17: #{tpu_custom_call.1} parent=1 // pred_fallthru
      _
    // Predicated region
    $region18: #{tpu_custom_call.1} parent=1 // pred_check
      _
    $region19: #{tpu_custom_call.1} parent=1 // pred_check_branch
      %63 = sbr.rel (0) target = $region21
    $region20: #{tpu_custom_call.1} parent=1 // pred_region
      %64 = dma.done [#allocation4], 32
    $region21: #{tpu_custom_call.1} parent=1 // pred_fallthru
      _
    %65 = vsyncpa [#allocation3], 1
    %66 = vsyncpa [#allocation4], 1

</llo_original>
